<compile_context>
chip_gen: v6e
topology: v6e:2x2x1
jax: 0.10.0
libtpu: 0.0.40
codegen_flags: <defaults>
</compile_context>

<pallas_src>
import jax
import jax.numpy as jnp
from jax.experimental import pallas as pl
from jax.experimental.pallas import tpu as pltpu

RESP_COLS = ['resp', 'resp_4']
RESP_INDEX = [RESP_COLS.index(r) for r in RESP_COLS]  # [0, 1]

_LANES = 128
_SUBLANES = 8
_MAX_TILE_ROWS = 4096          # 2 MiB per f32 stream per pipeline buffer


def _round_up(x, m):
    return ((x + m - 1) // m) * m


def _sigmoid(x, scaling):
    """sigmoid(scaling*x) == 0.5 + 0.5*tanh(0.5*scaling*x) — one EUP op, saturates safely."""
    return 0.5 + 0.5 * jnp.tanh((0.5 * scaling) * x)


def _vmem_limit_bytes():
    """Per-generation scoped-VMEM budget: half of physical, capped at 64 MiB."""
    cap = 64 << 20
    try:
        info = pltpu.get_tpu_info()
        cap = int(getattr(info, "vmem_capacity_bytes", cap) or cap)
    except Exception:          # no TPU visible at trace time, API drift, etc.
        pass
    return int(min(cap // 2, 64 << 20))   # v5e/v6e -> 64 MiB, v7x -> 32 MiB


def _pick_tile_rows(rows_needed, n_streams, vmem_limit, scratch_bytes):
    """Largest (TR, 128) row-tile s.t. double-buffered f32 streams fit the budget."""
    budget = int(vmem_limit * 0.6) - scratch_bytes
    per_row = n_streams * 2 * _LANES * 4           # bytes per row across streams & buffers
    tr = max(_SUBLANES, budget // per_row)
    tr = min(tr, _MAX_TILE_ROWS, _round_up(rows_needed, _SUBLANES))
    return int(max(_SUBLANES, (tr // _SUBLANES) * _SUBLANES))


def _make_mean_kernel(scaling, alpha_eff, ndays, tile_rows):
    """normalize == 'mean': per-day sums Pi via masked vreg-dense partial sums."""
    nblk = tile_rows // _SUBLANES

    def kernel(x_ref, t_ref, w_ref, d_ref, dates_ref, out_ref, pi_ref):
        i = pl.program_id(0)
        r = pl.program_id(1)

        @pl.when(jnp.logical_and(i == 0, r == 0))
        def _init():
            pi_ref[...] = jnp.zeros_like(pi_ref)

        x = x_ref[0].astype(jnp.float32)           # (TR, 128)
        t = t_ref[0].astype(jnp.float32)
        w = w_ref[...].astype(jnp.float32)         # (TR, 128); 0 in padding
        d = d_ref[...]                             # (TR, 128) f32 day ids
        prod = (w * t) * _sigmoid(x, scaling)      # padded lanes contribute 0

        # Per-day masked, vreg-dense partial sums (pure VPU in the steady
        # state; the cross-lane reduce happens only once, at finalize).
        for k in range(ndays):                     # ndays is small & static
            day = dates_ref[k]                     # SMEM scalar
            masked = jnp.where(d == day, prod, 0.0)
            pi_ref[k] += jnp.sum(masked.reshape(nblk, _SUBLANES, _LANES), axis=0)

        @pl.when(jnp.logical_and(i == pl.num_programs(0) - 1,
                                 r == pl.num_programs(1) - 1))
        def _finalize():
            acc = pi_ref[...]                                   # (ndays, 8, 128)
            pi = jnp.sum(acc, axis=1)                           # (ndays, 128)
            pi = jnp.sum(pi, axis=1, keepdims=True)             # (ndays, 1)
            sum_pi = jnp.sum(pi, axis=0, keepdims=True)         # (1, 1)
            sum_sq = jnp.sum(pi * pi, axis=0, keepdims=True)    # (1, 1)
            # NOTE: matches torch — if every Pi is 0 this is 0/0 = NaN.
            out_ref[...] = (-alpha_eff * sum_pi * jnp.maximum(sum_pi, 0.0)
                            / sum_sq / float(ndays))

    return kernel


def _make_sum_kernel(scaling, alpha_eff, ndays, tile_rows):
    """normalize != 'mean': only sum(w*t*sigmoid) is needed (padding has w == 0)."""
    nblk = tile_rows // _SUBLANES

    def kernel(x_ref, t_ref, w_ref, out_ref, acc_ref):
        i = pl.program_id(0)
        r = pl.program_id(1)

        @pl.when(jnp.logical_and(i == 0, r == 0))
        def _init():
            acc_ref[...] = jnp.zeros_like(acc_ref)

        x = x_ref[0].astype(jnp.float32)
        t = t_ref[0].astype(jnp.float32)
        w = w_ref[...].astype(jnp.float32)
        prod = (w * t) * _sigmoid(x, scaling)
        # vreg-wise accumulate; cross-lane reduce deferred to finalize
        acc_ref[...] += jnp.sum(prod.reshape(nblk, _SUBLANES, _LANES), axis=0)

        @pl.when(jnp.logical_and(i == pl.num_programs(0) - 1,
                                 r == pl.num_programs(1) - 1))
        def _finalize():
            s = jnp.sum(acc_ref[...], axis=0, keepdims=True)     # (1, 128)
            s = jnp.sum(s, axis=1, keepdims=True)                # (1, 1)
            out_ref[...] = -alpha_eff * s * jnp.maximum(s, 0.0) / float(ndays)

    return kernel


def utility_loss(inputs, targets, weights, date, *, alpha, scaling,
                 normalize='mean', resp_index=None, tile_rows=None, dates=None):
    """JAX/Pallas port of UtilityLoss.forward (returns negative utility scalar)."""
    # --- plain-JAX glue (column select / flatten / unique), matching torch ---
    if resp_index is not None and len(resp_index) < 5:
        idx = jnp.asarray(resp_index)
        inputs = inputs[..., idx]
        targets = targets[..., idx]

    n_targets = int(inputs.shape[-1])
    w1 = weights.reshape(-1)
    d1 = date.reshape(-1).astype(jnp.float32)
    n = int(w1.shape[0])                       # samples per repeat block

    # torch pairs flat index i with weights[i % n] / date[i % n] (the
    # .repeat((n_targets, 1)).view(-1) layout); viewing the flattened x/t as
    # (n_targets, n) reproduces that pairing with NO materialized tile of w/d.
    x2 = inputs.reshape(-1).reshape(n_targets, n)
    t2 = targets.reshape(-1).reshape(n_targets, n)

    if dates is None:
        dates = jnp.unique(d1)                 # sorted, like torch.unique
    dates = dates.astype(jnp.float32)
    ndays = int(dates.shape[0])
    alpha_eff = float(alpha) if normalize == 'mean' else float(alpha) * 0.001

    mean_path = (normalize == 'mean')
    n_streams = 4 if mean_path else 3
    vmem_cap = _vmem_limit_bytes()
    scratch_bytes = (ndays if mean_path else 1) * _SUBLANES * _LANES * 4
    rows_needed = pl.cdiv(n, _LANES)
    if tile_rows is None:
        tile_rows = _pick_tile_rows(rows_needed, n_streams, vmem_cap, scratch_bytes)
    tile_rows = max(_SUBLANES, (int(tile_rows) // _SUBLANES) * _SUBLANES)
    tile_rows = min(tile_rows, _round_up(rows_needed, _SUBLANES))

    # Pad the sample axis to a whole number of (tile_rows, 128) blocks; padding
    # carries w == 0 (and t == 0), so it never contributes to any sum.
    n_pad_total = _round_up(n, tile_rows * _LANES)
    pad = n_pad_total - n
    rows = n_pad_total // _LANES
    num_blocks = rows // tile_rows

    x3 = jnp.pad(x2, ((0, 0), (0, pad))).reshape(n_targets, rows, _LANES)
    t3 = jnp.pad(t2, ((0, 0), (0, pad))).reshape(n_targets, rows, _LANES)
    w3 = jnp.pad(w1, (0, pad)).reshape(rows, _LANES)

    x_spec = pl.BlockSpec((1, tile_rows, _LANES), lambda i, r: (r, i, 0))
    t_spec = pl.BlockSpec((1, tile_rows, _LANES), lambda i, r: (r, i, 0))
    w_spec = pl.BlockSpec((tile_rows, _LANES), lambda i, r: (i, 0))
    d_spec = pl.BlockSpec((tile_rows, _LANES), lambda i, r: (i, 0))
    out_spec = pl.BlockSpec((1, 1), lambda i, r: (0, 0))
    # Repeat axis innermost so the w/d blocks are re-used (not re-fetched) for
    # every resp column of the same sample block.
    grid = (num_blocks, n_targets)
    cparams = pltpu.CompilerParams(
        dimension_semantics=("arbitrary", "arbitrary"),
        vmem_limit_bytes=vmem_cap)

    if mean_path:
        d3 = jnp.pad(d1, (0, pad)).reshape(rows, _LANES)
        kernel = _make_mean_kernel(float(scaling), alpha_eff, ndays, tile_rows)
        out = pl.pallas_call(
            kernel,
            out_shape=jax.ShapeDtypeStruct((1, 1), jnp.float32),
            grid=grid,
            in_specs=[x_spec, t_spec, w_spec, d_spec,
                      pl.BlockSpec(memory_space=pltpu.MemorySpace.SMEM)],
            out_specs=out_spec,
            scratch_shapes=[pltpu.VMEM((ndays, _SUBLANES, _LANES), jnp.float32)],
            compiler_params=cparams,
        )(x3, t3, w3, d3, dates)
        return out[0, 0]

    kernel = _make_sum_kernel(float(scaling), alpha_eff, ndays, tile_rows)
    out = pl.pallas_call(
        kernel,
        out_shape=jax.ShapeDtypeStruct((1, 1), jnp.float32),
        grid=grid,
        in_specs=[x_spec, t_spec, w_spec],
        out_specs=out_spec,
        scratch_shapes=[pltpu.VMEM((_SUBLANES, _LANES), jnp.float32)],
        compiler_params=cparams,
    )(x3, t3, w3)
    return out[0, 0]


def utility_loss_reference(inputs, targets, weights, date, *, alpha, scaling,
                           normalize='mean', resp_index=None):
    """Pure-JAX reference, mirrors the PyTorch forward line-by-line."""
    if resp_index is not None and len(resp_index) < 5:
        idx = jnp.asarray(resp_index)
        inputs = inputs[..., idx]
        targets = targets[..., idx]
    s = 1.0 / (1.0 + jnp.exp(-scaling * inputs))
    n_targets = s.shape[-1]
    if n_targets > 1:
        weights = jnp.tile(weights[None, :], (n_targets, 1))
        date = jnp.tile(date[None, :], (n_targets, 1))
    si = s.reshape(-1)
    ti = targets.reshape(-1).astype(jnp.float32)
    w = weights.reshape(-1).astype(jnp.float32)
    d = date.reshape(-1).astype(jnp.float32)
    dates = jnp.unique(d)
    ndays = dates.shape[0]
    Pi = jnp.stack([jnp.sum(jnp.where(d == day, w * ti * si, 0.0)) for day in dates])
    sum_pi = Pi.sum()
    alpha_eff = alpha if normalize == 'mean' else alpha * 0.001
    if normalize == 'mean':
        return -alpha_eff * sum_pi * jnp.maximum(sum_pi, 0.0) / jnp.sum(Pi ** 2) / ndays
    return -alpha_eff * sum_pi * jnp.maximum(sum_pi, 0.0) / ndays


if __name__ == "__main__":
    key = jax.random.PRNGKey(0)
    k1, k2, k3, k4 = jax.random.split(key, 4)

    batch = 2048
    n_resp = len(RESP_COLS)                          # 2 resp columns
    inputs = jax.random.normal(k1, (batch, n_resp), dtype=jnp.float32)
    targets = 0.05 * jax.random.normal(k2, (batch, n_resp), dtype=jnp.float32)
    weights = jax.random.uniform(k3, (batch,), dtype=jnp.float32,
                                 minval=0.0, maxval=2.0)
    date = jax.random.randint(k4, (batch,), 0, 6).astype(jnp.float32)  # 6 days

    alpha, scaling = 1.0, 12.0

    # 'mean' path: rows = 16, tile_rows = 8 -> grid (2 blocks, 2 resp) = 4 steps.
    loss = utility_loss(inputs, targets, weights, date, alpha=alpha,
                        scaling=scaling, normalize='mean',
                        resp_index=RESP_INDEX, tile_rows=8)
    loss = jax.block_until_ready(loss)
    ref = utility_loss_reference(inputs, targets, weights, date, alpha=alpha,
                                 scaling=scaling, normalize='mean',
                                 resp_index=RESP_INDEX)
    ref = jax.block_until_ready(ref)
    assert jnp.isfinite(loss), "mean-path kernel produced non-finite loss"
    assert jnp.allclose(loss, ref, rtol=2e-3, atol=1e-5), (
        f"mean-path mismatch: kernel={float(loss)} ref={float(ref)}")

    # non-'mean' fast path: auto tile size (clamped to the data), vreg accumulator.
    loss_s = utility_loss(inputs, targets, weights, date, alpha=alpha,
                          scaling=scaling, normalize='none',
                          resp_index=RESP_INDEX)
    loss_s = jax.block_until_ready(loss_s)
    ref_s = utility_loss_reference(inputs, targets, weights, date, alpha=alpha,
                                   scaling=scaling, normalize='none',
                                   resp_index=RESP_INDEX)
    ref_s = jax.block_until_ready(ref_s)
    assert jnp.isfinite(loss_s), "fast-path kernel produced non-finite loss"
    assert jnp.allclose(loss_s, ref_s, rtol=2e-3, atol=1e-5), (
        f"fast-path mismatch: kernel={float(loss_s)} ref={float(ref_s)}")

    print("KERNEL_OK")
</pallas_src>

<mosaic_0001>
module attributes {stable_mosaic.version = 11 : i64} {
  func.func @kernel(%arg0: i32, %arg1: i32, %arg2: memref<1x8x128xf32, #tpu.memory_space<vmem>>, %arg3: memref<1x8x128xf32, #tpu.memory_space<vmem>>, %arg4: memref<8x128xf32, #tpu.memory_space<vmem>>, %arg5: memref<8x128xf32, #tpu.memory_space<vmem>>, %arg6: memref<6xf32, #tpu.memory_space<smem>>, %arg7: memref<1x1xf32, #tpu.memory_space<vmem>>, %arg8: memref<6x8x128xf32, #tpu.memory_space<vmem>>) attributes {dimension_semantics = [#tpu.dimension_semantics<arbitrary>, #tpu.dimension_semantics<arbitrary>], iteration_bounds = array<i64: 2, 2>, scalar_prefetch = 0 : i64, scratch_operands = 1 : i64, tpu.core_type = #tpu.core_type<tc>, window_params = [{transform_indices = @transform_0, window_bounds = array<i64: 1, 8, 128>}, {transform_indices = @transform_1, window_bounds = array<i64: 1, 8, 128>}, {transform_indices = @transform_2, window_bounds = array<i64: 8, 128>}, {transform_indices = @transform_3, window_bounds = array<i64: 8, 128>}, {transform_indices = @transform_4, window_bounds = array<i64: 6>}, {pipeline_mode = #tpu.pipeline_mode<synchronous>, transform_indices = @transform_5, window_bounds = array<i64: 1, 1>}]} {
    %c0_i32 = arith.constant 0 : i32
    %0 = arith.cmpi eq, %arg0, %c0_i32 : i32
    %c0_i32_0 = arith.constant 0 : i32
    %1 = arith.cmpi eq, %arg1, %c0_i32_0 : i32
    %2 = arith.andi %0, %1 : i1
    %3 = arith.extui %2 : i1 to i32
    %c0_i32_1 = arith.constant 0 : i32
    %4 = arith.cmpi ne, %3, %c0_i32_1 : i32
    scf.if %4 {
      %cst_64 = arith.constant 0.000000e+00 : f32
      %103 = vector.broadcast %cst_64 : f32 to vector<6x8x128xf32>
      %c0_65 = arith.constant 0 : index
      %c0_66 = arith.constant 0 : index
      %c0_67 = arith.constant 0 : index
      %104 = vector.load %arg8[%c0_65, %c0_66, %c0_67] : memref<6x8x128xf32, #tpu.memory_space<vmem>>, vector<6x8x128xf32>
      tpu.vector_store %arg8[%c0_65, %c0_66, %c0_67], %103 {strides = array<i32>} : memref<6x8x128xf32, #tpu.memory_space<vmem>>, vector<6x8x128xf32>,
    } else {
    }
    %c0 = arith.constant 0 : index
    %c0_2 = arith.constant 0 : index
    %c0_3 = arith.constant 0 : index
    %5 = vector.load %arg2[%c0, %c0_2, %c0_3] : memref<1x8x128xf32, #tpu.memory_space<vmem>>, vector<1x8x128xf32>
    %6 = vector.shape_cast %5 : vector<1x8x128xf32> to vector<8x128xf32>
    %c0_4 = arith.constant 0 : index
    %c0_5 = arith.constant 0 : index
    %c0_6 = arith.constant 0 : index
    %7 = vector.load %arg3[%c0_4, %c0_5, %c0_6] : memref<1x8x128xf32, #tpu.memory_space<vmem>>, vector<1x8x128xf32>
    %8 = vector.shape_cast %7 : vector<1x8x128xf32> to vector<8x128xf32>
    %c0_7 = arith.constant 0 : index
    %c0_8 = arith.constant 0 : index
    %9 = vector.load %arg4[%c0_7, %c0_8] : memref<8x128xf32, #tpu.memory_space<vmem>>, vector<8x128xf32>
    %c0_9 = arith.constant 0 : index
    %c0_10 = arith.constant 0 : index
    %10 = vector.load %arg5[%c0_9, %c0_10] : memref<8x128xf32, #tpu.memory_space<vmem>>, vector<8x128xf32>
    %11 = arith.mulf %9, %8 : vector<8x128xf32>
    %cst = arith.constant 6.000000e+00 : f32
    %12 = vector.broadcast %cst : f32 to vector<8x128xf32>
    %13 = arith.mulf %12, %6 : vector<8x128xf32>
    %14 = math.tanh %13 : vector<8x128xf32>
    %cst_11 = arith.constant 5.000000e-01 : f32
    %15 = vector.broadcast %cst_11 : f32 to vector<8x128xf32>
    %16 = arith.mulf %15, %14 : vector<8x128xf32>
    %cst_12 = arith.constant 5.000000e-01 : f32
    %17 = vector.broadcast %cst_12 : f32 to vector<8x128xf32>
    %18 = arith.addf %17, %16 : vector<8x128xf32>
    %19 = arith.mulf %11, %18 : vector<8x128xf32>
    %c0_13 = arith.constant 0 : index
    %20 = memref.load %arg6[%c0_13] : memref<6xf32, #tpu.memory_space<smem>>
    %21 = vector.broadcast %20 : f32 to vector<8x128xf32>
    %22 = arith.cmpf oeq, %10, %21 : vector<8x128xf32>
    %cst_14 = arith.constant 0.000000e+00 : f32
    %23 = vector.broadcast %cst_14 : f32 to vector<8x128xf32>
    %24 = arith.select %22, %19, %23 : vector<8x128xi1>, vector<8x128xf32>
    %c0_15 = arith.constant 0 : index
    %c0_16 = arith.constant 0 : index
    %c0_17 = arith.constant 0 : index
    %25 = vector.load %arg8[%c0_15, %c0_16, %c0_17] : memref<6x8x128xf32, #tpu.memory_space<vmem>>, vector<1x8x128xf32>
    %26 = vector.shape_cast %25 : vector<1x8x128xf32> to vector<8x128xf32>
    %27 = vector.shape_cast %24 : vector<8x128xf32> to vector<1x8x128xf32>
    %cst_18 = arith.constant dense<0.000000e+00> : vector<8x128xf32>
    %28 = vector.multi_reduction <add>, %27, %cst_18 [0] : vector<1x8x128xf32> to vector<8x128xf32>
    %29 = arith.addf %26, %28 : vector<8x128xf32>
    %c0_19 = arith.constant 0 : index
    %c0_20 = arith.constant 0 : index
    %c0_21 = arith.constant 0 : index
    %30 = vector.load %arg8[%c0_19, %c0_20, %c0_21] : memref<6x8x128xf32, #tpu.memory_space<vmem>>, vector<1x8x128xf32>
    %31 = vector.shape_cast %30 : vector<1x8x128xf32> to vector<8x128xf32>
    %32 = vector.shape_cast %29 : vector<8x128xf32> to vector<1x8x128xf32>
    tpu.vector_store %arg8[%c0_19, %c0_20, %c0_21], %32 {strides = array<i32>} : memref<6x8x128xf32, #tpu.memory_space<vmem>>, vector<1x8x128xf32>,
    %c1 = arith.constant 1 : index
    %33 = memref.load %arg6[%c1] : memref<6xf32, #tpu.memory_space<smem>>
    %34 = vector.broadcast %33 : f32 to vector<8x128xf32>
    %35 = arith.cmpf oeq, %10, %34 : vector<8x128xf32>
    %cst_22 = arith.constant 0.000000e+00 : f32
    %36 = vector.broadcast %cst_22 : f32 to vector<8x128xf32>
    %37 = arith.select %35, %19, %36 : vector<8x128xi1>, vector<8x128xf32>
    %c1_23 = arith.constant 1 : index
    %c0_24 = arith.constant 0 : index
    %c0_25 = arith.constant 0 : index
    %38 = vector.load %arg8[%c1_23, %c0_24, %c0_25] : memref<6x8x128xf32, #tpu.memory_space<vmem>>, vector<1x8x128xf32>
    %39 = vector.shape_cast %38 : vector<1x8x128xf32> to vector<8x128xf32>
    %40 = vector.shape_cast %37 : vector<8x128xf32> to vector<1x8x128xf32>
    %cst_26 = arith.constant dense<0.000000e+00> : vector<8x128xf32>
    %41 = vector.multi_reduction <add>, %40, %cst_26 [0] : vector<1x8x128xf32> to vector<8x128xf32>
    %42 = arith.addf %39, %41 : vector<8x128xf32>
    %c1_27 = arith.constant 1 : index
    %c0_28 = arith.constant 0 : index
    %c0_29 = arith.constant 0 : index
    %43 = vector.load %arg8[%c1_27, %c0_28, %c0_29] : memref<6x8x128xf32, #tpu.memory_space<vmem>>, vector<1x8x128xf32>
    %44 = vector.shape_cast %43 : vector<1x8x128xf32> to vector<8x128xf32>
    %45 = vector.shape_cast %42 : vector<8x128xf32> to vector<1x8x128xf32>
    tpu.vector_store %arg8[%c1_27, %c0_28, %c0_29], %45 {strides = array<i32>} : memref<6x8x128xf32, #tpu.memory_space<vmem>>, vector<1x8x128xf32>,
    %c2 = arith.constant 2 : index
    %46 = memref.load %arg6[%c2] : memref<6xf32, #tpu.memory_space<smem>>
    %47 = vector.broadcast %46 : f32 to vector<8x128xf32>
    %48 = arith.cmpf oeq, %10, %47 : vector<8x128xf32>
    %cst_30 = arith.constant 0.000000e+00 : f32
    %49 = vector.broadcast %cst_30 : f32 to vector<8x128xf32>
    %50 = arith.select %48, %19, %49 : vector<8x128xi1>, vector<8x128xf32>
    %c2_31 = arith.constant 2 : index
    %c0_32 = arith.constant 0 : index
    %c0_33 = arith.constant 0 : index
    %51 = vector.load %arg8[%c2_31, %c0_32, %c0_33] : memref<6x8x128xf32, #tpu.memory_space<vmem>>, vector<1x8x128xf32>
    %52 = vector.shape_cast %51 : vector<1x8x128xf32> to vector<8x128xf32>
    %53 = vector.shape_cast %50 : vector<8x128xf32> to vector<1x8x128xf32>
    %cst_34 = arith.constant dense<0.000000e+00> : vector<8x128xf32>
    %54 = vector.multi_reduction <add>, %53, %cst_34 [0] : vector<1x8x128xf32> to vector<8x128xf32>
    %55 = arith.addf %52, %54 : vector<8x128xf32>
    %c2_35 = arith.constant 2 : index
    %c0_36 = arith.constant 0 : index
    %c0_37 = arith.constant 0 : index
    %56 = vector.load %arg8[%c2_35, %c0_36, %c0_37] : memref<6x8x128xf32, #tpu.memory_space<vmem>>, vector<1x8x128xf32>
    %57 = vector.shape_cast %56 : vector<1x8x128xf32> to vector<8x128xf32>
    %58 = vector.shape_cast %55 : vector<8x128xf32> to vector<1x8x128xf32>
    tpu.vector_store %arg8[%c2_35, %c0_36, %c0_37], %58 {strides = array<i32>} : memref<6x8x128xf32, #tpu.memory_space<vmem>>, vector<1x8x128xf32>,
    %c3 = arith.constant 3 : index
    %59 = memref.load %arg6[%c3] : memref<6xf32, #tpu.memory_space<smem>>
    %60 = vector.broadcast %59 : f32 to vector<8x128xf32>
    %61 = arith.cmpf oeq, %10, %60 : vector<8x128xf32>
    %cst_38 = arith.constant 0.000000e+00 : f32
    %62 = vector.broadcast %cst_38 : f32 to vector<8x128xf32>
    %63 = arith.select %61, %19, %62 : vector<8x128xi1>, vector<8x128xf32>
    %c3_39 = arith.constant 3 : index
    %c0_40 = arith.constant 0 : index
    %c0_41 = arith.constant 0 : index
    %64 = vector.load %arg8[%c3_39, %c0_40, %c0_41] : memref<6x8x128xf32, #tpu.memory_space<vmem>>, vector<1x8x128xf32>
    %65 = vector.shape_cast %64 : vector<1x8x128xf32> to vector<8x128xf32>
    %66 = vector.shape_cast %63 : vector<8x128xf32> to vector<1x8x128xf32>
    %cst_42 = arith.constant dense<0.000000e+00> : vector<8x128xf32>
    %67 = vector.multi_reduction <add>, %66, %cst_42 [0] : vector<1x8x128xf32> to vector<8x128xf32>
    %68 = arith.addf %65, %67 : vector<8x128xf32>
    %c3_43 = arith.constant 3 : index
    %c0_44 = arith.constant 0 : index
    %c0_45 = arith.constant 0 : index
    %69 = vector.load %arg8[%c3_43, %c0_44, %c0_45] : memref<6x8x128xf32, #tpu.memory_space<vmem>>, vector<1x8x128xf32>
    %70 = vector.shape_cast %69 : vector<1x8x128xf32> to vector<8x128xf32>
    %71 = vector.shape_cast %68 : vector<8x128xf32> to vector<1x8x128xf32>
    tpu.vector_store %arg8[%c3_43, %c0_44, %c0_45], %71 {strides = array<i32>} : memref<6x8x128xf32, #tpu.memory_space<vmem>>, vector<1x8x128xf32>,
    %c4 = arith.constant 4 : index
    %72 = memref.load %arg6[%c4] : memref<6xf32, #tpu.memory_space<smem>>
    %73 = vector.broadcast %72 : f32 to vector<8x128xf32>
    %74 = arith.cmpf oeq, %10, %73 : vector<8x128xf32>
    %cst_46 = arith.constant 0.000000e+00 : f32
    %75 = vector.broadcast %cst_46 : f32 to vector<8x128xf32>
    %76 = arith.select %74, %19, %75 : vector<8x128xi1>, vector<8x128xf32>
    %c4_47 = arith.constant 4 : index
    %c0_48 = arith.constant 0 : index
    %c0_49 = arith.constant 0 : index
    %77 = vector.load %arg8[%c4_47, %c0_48, %c0_49] : memref<6x8x128xf32, #tpu.memory_space<vmem>>, vector<1x8x128xf32>
    %78 = vector.shape_cast %77 : vector<1x8x128xf32> to vector<8x128xf32>
    %79 = vector.shape_cast %76 : vector<8x128xf32> to vector<1x8x128xf32>
    %cst_50 = arith.constant dense<0.000000e+00> : vector<8x128xf32>
    %80 = vector.multi_reduction <add>, %79, %cst_50 [0] : vector<1x8x128xf32> to vector<8x128xf32>
    %81 = arith.addf %78, %80 : vector<8x128xf32>
    %c4_51 = arith.constant 4 : index
    %c0_52 = arith.constant 0 : index
    %c0_53 = arith.constant 0 : index
    %82 = vector.load %arg8[%c4_51, %c0_52, %c0_53] : memref<6x8x128xf32, #tpu.memory_space<vmem>>, vector<1x8x128xf32>
    %83 = vector.shape_cast %82 : vector<1x8x128xf32> to vector<8x128xf32>
    %84 = vector.shape_cast %81 : vector<8x128xf32> to vector<1x8x128xf32>
    tpu.vector_store %arg8[%c4_51, %c0_52, %c0_53], %84 {strides = array<i32>} : memref<6x8x128xf32, #tpu.memory_space<vmem>>, vector<1x8x128xf32>,
    %c5 = arith.constant 5 : index
    %85 = memref.load %arg6[%c5] : memref<6xf32, #tpu.memory_space<smem>>
    %86 = vector.broadcast %85 : f32 to vector<8x128xf32>
    %87 = arith.cmpf oeq, %10, %86 : vector<8x128xf32>
    %cst_54 = arith.constant 0.000000e+00 : f32
    %88 = vector.broadcast %cst_54 : f32 to vector<8x128xf32>
    %89 = arith.select %87, %19, %88 : vector<8x128xi1>, vector<8x128xf32>
    %c5_55 = arith.constant 5 : index
    %c0_56 = arith.constant 0 : index
    %c0_57 = arith.constant 0 : index
    %90 = vector.load %arg8[%c5_55, %c0_56, %c0_57] : memref<6x8x128xf32, #tpu.memory_space<vmem>>, vector<1x8x128xf32>
    %91 = vector.shape_cast %90 : vector<1x8x128xf32> to vector<8x128xf32>
    %92 = vector.shape_cast %89 : vector<8x128xf32> to vector<1x8x128xf32>
    %cst_58 = arith.constant dense<0.000000e+00> : vector<8x128xf32>
    %93 = vector.multi_reduction <add>, %92, %cst_58 [0] : vector<1x8x128xf32> to vector<8x128xf32>
    %94 = arith.addf %91, %93 : vector<8x128xf32>
    %c5_59 = arith.constant 5 : index
    %c0_60 = arith.constant 0 : index
    %c0_61 = arith.constant 0 : index
    %95 = vector.load %arg8[%c5_59, %c0_60, %c0_61] : memref<6x8x128xf32, #tpu.memory_space<vmem>>, vector<1x8x128xf32>
    %96 = vector.shape_cast %95 : vector<1x8x128xf32> to vector<8x128xf32>
    %97 = vector.shape_cast %94 : vector<8x128xf32> to vector<1x8x128xf32>
    tpu.vector_store %arg8[%c5_59, %c0_60, %c0_61], %97 {strides = array<i32>} : memref<6x8x128xf32, #tpu.memory_space<vmem>>, vector<1x8x128xf32>,
    %c1_i32 = arith.constant 1 : i32
    %98 = arith.cmpi eq, %arg0, %c1_i32 : i32
    %c1_i32_62 = arith.constant 1 : i32
    %99 = arith.cmpi eq, %arg1, %c1_i32_62 : i32
    %100 = arith.andi %98, %99 : i1
    %101 = arith.extui %100 : i1 to i32
    %c0_i32_63 = arith.constant 0 : i32
    %102 = arith.cmpi ne, %101, %c0_i32_63 : i32
    scf.if %102 {
      %c0_64 = arith.constant 0 : index
      %c0_65 = arith.constant 0 : index
      %c0_66 = arith.constant 0 : index
      %103 = vector.load %arg8[%c0_64, %c0_65, %c0_66] : memref<6x8x128xf32, #tpu.memory_space<vmem>>, vector<6x8x128xf32>
      %cst_67 = arith.constant dense<0.000000e+00> : vector<6x128xf32>
      %104 = vector.multi_reduction <add>, %103, %cst_67 [1] : vector<6x8x128xf32> to vector<6x128xf32>
      %cst_68 = arith.constant dense<0.000000e+00> : vector<6xf32>
      %105 = vector.multi_reduction <add>, %104, %cst_68 [1] : vector<6x128xf32> to vector<6xf32>
      %106 = vector.shape_cast %105 : vector<6xf32> to vector<6x1xf32>
      %cst_69 = arith.constant dense<0.000000e+00> : vector<1xf32>
      %107 = vector.multi_reduction <add>, %106, %cst_69 [0] : vector<6x1xf32> to vector<1xf32>
      %108 = vector.shape_cast %107 : vector<1xf32> to vector<1x1xf32>
      %109 = arith.mulf %106, %106 : vector<6x1xf32>
      %cst_70 = arith.constant dense<0.000000e+00> : vector<1xf32>
      %110 = vector.multi_reduction <add>, %109, %cst_70 [0] : vector<6x1xf32> to vector<1xf32>
      %111 = vector.shape_cast %110 : vector<1xf32> to vector<1x1xf32>
      %cst_71 = arith.constant -1.000000e+00 : f32
      %112 = vector.broadcast %cst_71 : f32 to vector<1x1xf32>
      %113 = arith.mulf %112, %108 : vector<1x1xf32>
      %cst_72 = arith.constant 0.000000e+00 : f32
      %114 = vector.broadcast %cst_72 : f32 to vector<1x1xf32>
      %115 = arith.maximumf %108, %114 : vector<1x1xf32>
      %116 = arith.mulf %113, %115 : vector<1x1xf32>
      %117 = arith.divf %116, %111 : vector<1x1xf32>
      %cst_73 = arith.constant 6.000000e+00 : f32
      %118 = vector.broadcast %cst_73 : f32 to vector<1x1xf32>
      %119 = arith.divf %117, %118 : vector<1x1xf32>
      %c0_74 = arith.constant 0 : index
      %c0_75 = arith.constant 0 : index
      %120 = vector.load %arg7[%c0_74, %c0_75] : memref<1x1xf32, #tpu.memory_space<vmem>>, vector<1x1xf32>
      tpu.vector_store %arg7[%c0_74, %c0_75], %119 {strides = array<i32>} : memref<1x1xf32, #tpu.memory_space<vmem>>, vector<1x1xf32>,
    } else {
    }
    return
  }
  func.func @transform_0(%arg0: i32, %arg1: i32) -> (i32, i32, i32) {
    %c0_i32 = arith.constant 0 : i32
    %c0_i32_0 = arith.constant 0 : i32
    return %arg1, %arg0, %c0_i32 : i32, i32, i32
  }
  func.func @transform_1(%arg0: i32, %arg1: i32) -> (i32, i32, i32) {
    %c0_i32 = arith.constant 0 : i32
    %c0_i32_0 = arith.constant 0 : i32
    return %arg1, %arg0, %c0_i32 : i32, i32, i32
  }
  func.func @transform_2(%arg0: i32, %arg1: i32) -> (i32, i32) {
    %c0_i32 = arith.constant 0 : i32
    %c0_i32_0 = arith.constant 0 : i32
    return %arg0, %c0_i32 : i32, i32
  }
  func.func @transform_3(%arg0: i32, %arg1: i32) -> (i32, i32) {
    %c0_i32 = arith.constant 0 : i32
    %c0_i32_0 = arith.constant 0 : i32
    return %arg0, %c0_i32 : i32, i32
  }
  func.func @transform_4(%arg0: i32, %arg1: i32) -> i32 {
    %c0_i32 = arith.constant 0 : i32
    %c0_i32_0 = arith.constant 0 : i32
    return %c0_i32 : i32
  }
  func.func @transform_5(%arg0: i32, %arg1: i32) -> (i32, i32) {
    %c0_i32 = arith.constant 0 : i32
    %c0_i32_0 = arith.constant 0 : i32
    %c0_i32_1 = arith.constant 0 : i32
    return %c0_i32, %c0_i32_0 : i32, i32
  }
}

</mosaic_0001>

<llo_original>
// kernel: tpu_custom_call.1
$region0: #{tpu_custom_call.1}
  #allocation0 [shape = 'u32[]', space=smem, size = 0x4, offset = 0x4, fixed_abs, tag = 'smem constant byte address 0x4 - core index']
  #allocation1 [shape = 'u32[144,128]{1,0:T(1,128)}', space=vmem, size = 0x12000, scoped, tag = 'internal scratch']
  #allocation2 [shape = 'f32[6,8,128]{2,1,0:T(8,128)}', space=vmem, size = 0x6000, scoped, tag = 'scratch operand']
  %s0 = inlined_call_operand.hbm [shape: f32[2,16,128], index: 0, kind: input, shape index: {}]
  %s1 = inlined_call_operand.hbm [shape: f32[2,16,128], index: 1, kind: input, shape index: {}]
  %s2 = inlined_call_operand.hbm [shape: f32[16,128], index: 2, kind: input, shape index: {}]
  %s3 = inlined_call_operand.hbm [shape: f32[16,128], index: 3, kind: input, shape index: {}]
  %s4 = inlined_call_operand.vmem [shape: f32[6], index: 4, kind: input, shape index: {}]
  %s5 = inlined_call_operand.hbm [shape: f32[1,1], index: 5, kind: output, shape index: {}]
  %s6 = sld [smem:[#allocation0]]
  $region81: #{tpu_custom_call.1} parent=0
    _
  %s8 = ssub.s32 1, %s6
  %s9 = scalar_select 0, %s8, %s6
  $region1: #{tpu_custom_call.1} parent=0
    #allocation3 [shape = 'u8[8192]{0}', space=vmem, size = 0x2000, scoped, tag = 'input window, operand 0']
    #allocation4 [shape = 's32[2]{0}', space=sflag, size = 0x8, scoped, tag = 'scoped memory for tpu_custom_call.1']
    #allocation5 [shape = 's32[2]{0}', space=sflag, size = 0x8, scoped, tag = 'scoped memory for tpu_custom_call.1']
    #allocation6 [shape = 's32[2]{0}', space=sflag, size = 0x8, scoped, tag = 'scoped memory for tpu_custom_call.1']
    #allocation7 [shape = 'u8[8192]{0}', space=vmem, size = 0x2000, scoped, tag = 'input window, operand 1']
    #allocation8 [shape = 's32[2]{0}', space=sflag, size = 0x8, scoped, tag = 'scoped memory for tpu_custom_call.1']
    #allocation9 [shape = 'u8[8192]{0}', space=vmem, size = 0x2000, scoped, tag = 'input window, operand 2']
    #allocation10 [shape = 'u8[8192]{0}', space=vmem, size = 0x2000, scoped, tag = 'input window, operand 3']
    #allocation11 [shape = 's32[2]{0}', space=sflag, size = 0x8, scoped, tag = 'scoped memory for tpu_custom_call.1']
    #allocation12 [shape = 'u8[512]{0}', space=smem, size = 0x200, scoped, tag = 'input window, operand 4, single buffered']
    #allocation13 [shape = 'u8[512]{0}', space=vmem, size = 0x400, scoped, tag = 'output window, operand 0, single buffered']
    %10 = vsyncpa [#allocation4], 0
    %s11 = scalar_lea.sflag [#allocation4], 1
    %12 = vsyncpa %s11, 0
    %13 = vsyncpa [#allocation8], 0
    %s14 = scalar_lea.sflag [#allocation8], 1
    %15 = vsyncpa %s14, 0
    %16 = vsyncpa [#allocation11], 0
    %s17 = scalar_lea.sflag [#allocation11], 1
    %18 = vsyncpa %s17, 0
    %19 = vsyncpa [#allocation6], 0
    %20 = vsyncpa [#allocation5], 0
    loop: start=0, step=1, limit=6
    $region2: #{tpu_custom_call.1} parent=1 // loop_pre_header
      _
    $region3: #{tpu_custom_call.1} parent=1 // loop_header
      %s22 = sphi 0, %s26
      %p23 = scmp.ge.s32.totalorder %s22, 6
      %s29 = sphi 0, %s41
      %s30 = sphi 0, %s37
      %s31 = sphi 0, %s29
      %s32 = sphi 0, %s30
      %s33 = sphi 0, %s31
      %s34 = sphi 0, %s32
      %s46 = sphi 0, %s48
      %s49 = sphi 0, %s46
      %s50 = sphi 0, %s49
      %s66 = sphi 0, %s50
      %s74 = sphi 0, %s76
      %s77 = sphi 0, %s74
      %s78 = sphi 0, %s77
      %s94 = sphi 0, %s78
      %s100 = sphi 0, %s102
      %s103 = sphi 0, %s100
      %s104 = sphi 0, %s103
      %s120 = sphi 0, %s104
      %s126 = sphi 0, %s128
      %s129 = sphi 0, %s126
      %s130 = sphi 0, %s129
      %s146 = sphi 0, %s130
      %s150 = sphi 0, %s150
      %s152 = sphi 0, %s150
      %s153 = sphi 0, %s152
      %s167 = sphi 0, %s153
      %s171 = sphi 0, %s171
      %s173 = sphi 0, %s171
      %s174 = sphi 0, %s173
      %s188 = sphi 0, %s174
    $region4: #{tpu_custom_call.1} parent=1 // loop_header_branch
      %25 = sbr.rel (%p23) target = $region8
    $region5: #{tpu_custom_call.1} parent=1 // loop_body
      %s27 = ssub.s32 %s22, 1
      %s28 = ssub.s32 %s22, 2
      %s35 = sadd.s32 1, %s30
      %p36 = scmp.ge.s32.totalorder %s35, 2
      %s37 = scalar_select %p36, 0, %s35
      %s38 = sadd.s32 1, %s29
      %s39 = scalar_select %p36, %s38, %s29
      %p40 = scmp.ge.s32.totalorder %s39, 2
      %s41 = scalar_select %p40, 0, %s39
      %s42 = ssub.s32 %s30, %s37
      %s43 = ssub.s32 %s29, %s41
      %s44 = sor.u32 %s42, %s43
      %p45 = scmp.eq.s32.totalorder %s44, 0
      %s47 = sadd.s32 %s46, 1
      %s48 = scalar_select %p45, %s46, %s47
      %p51 = pneg %p45
      %p52 = scmp.eq.s32.totalorder %s22, 3
      %p53 = por %p51, %p52
      %p54 = scmp.ne.s32.totalorder %s46, %s49
      %p55 = scmp.eq.s32.totalorder %s22, 0
      %p56 = por %p54, %p55
      %p57 = scmp.ne.s32.totalorder %s46, %s49
      %p58 = scmp.eq.s32.totalorder %s27, 3
      %p59 = por %p57, %p58
      %p60 = scmp.ne.s32.totalorder %s49, %s50
      %p61 = scmp.eq.s32.totalorder %s27, 0
      %p62 = por %p60, %p61
      %p63 = scmp.ne.s32.totalorder %s49, %s50
      %p64 = scmp.eq.s32.totalorder %s28, 3
      %p65 = por %p63, %p64
      %p67 = scmp.ne.s32.totalorder %s50, %s66
      %p68 = scmp.eq.s32.totalorder %s28, 0
      %p69 = por %p67, %p68
      %s70 = ssub.s32 %s30, %s37
      %s71 = ssub.s32 %s29, %s41
      %s72 = sor.u32 %s70, %s71
      %p73 = scmp.eq.s32.totalorder %s72, 0
      %s75 = sadd.s32 %s74, 1
      %s76 = scalar_select %p73, %s74, %s75
      %p79 = pneg %p73
      %p80 = scmp.eq.s32.totalorder %s22, 3
      %p81 = por %p79, %p80
      %p82 = scmp.ne.s32.totalorder %s74, %s77
      %p83 = scmp.eq.s32.totalorder %s22, 0
      %p84 = por %p82, %p83
      %p85 = scmp.ne.s32.totalorder %s74, %s77
      %p86 = scmp.eq.s32.totalorder %s27, 3
      %p87 = por %p85, %p86
      %p88 = scmp.ne.s32.totalorder %s77, %s78
      %p89 = scmp.eq.s32.totalorder %s27, 0
      %p90 = por %p88, %p89
      %p91 = scmp.ne.s32.totalorder %s77, %s78
      %p92 = scmp.eq.s32.totalorder %s28, 3
      %p93 = por %p91, %p92
      %p95 = scmp.ne.s32.totalorder %s78, %s94
      %p96 = scmp.eq.s32.totalorder %s28, 0
      %p97 = por %p95, %p96
      %s98 = ssub.s32 %s29, %s41
      %p99 = scmp.eq.s32.totalorder %s98, 0
      %s101 = sadd.s32 %s100, 1
      %s102 = scalar_select %p99, %s100, %s101
      %p105 = pneg %p99
      %p106 = scmp.eq.s32.totalorder %s22, 3
      %p107 = por %p105, %p106
      %p108 = scmp.ne.s32.totalorder %s100, %s103
      %p109 = scmp.eq.s32.totalorder %s22, 0
      %p110 = por %p108, %p109
      %p111 = scmp.ne.s32.totalorder %s100, %s103
      %p112 = scmp.eq.s32.totalorder %s27, 3
      %p113 = por %p111, %p112
      %p114 = scmp.ne.s32.totalorder %s103, %s104
      %p115 = scmp.eq.s32.totalorder %s27, 0
      %p116 = por %p114, %p115
      %p117 = scmp.ne.s32.totalorder %s103, %s104
      %p118 = scmp.eq.s32.totalorder %s28, 3
      %p119 = por %p117, %p118
      %p121 = scmp.ne.s32.totalorder %s104, %s120
      %p122 = scmp.eq.s32.totalorder %s28, 0
      %p123 = por %p121, %p122
      %s124 = ssub.s32 %s29, %s41
      %p125 = scmp.eq.s32.totalorder %s124, 0
      %s127 = sadd.s32 %s126, 1
      %s128 = scalar_select %p125, %s126, %s127
      %p131 = pneg %p125
      %p132 = scmp.eq.s32.totalorder %s22, 3
      %p133 = por %p131, %p132
      %p134 = scmp.ne.s32.totalorder %s126, %s129
      %p135 = scmp.eq.s32.totalorder %s22, 0
      %p136 = por %p134, %p135
      %p137 = scmp.ne.s32.totalorder %s126, %s129
      %p138 = scmp.eq.s32.totalorder %s27, 3
      %p139 = por %p137, %p138
      %p140 = scmp.ne.s32.totalorder %s129, %s130
      %p141 = scmp.eq.s32.totalorder %s27, 0
      %p142 = por %p140, %p141
      %p143 = scmp.ne.s32.totalorder %s129, %s130
      %p144 = scmp.eq.s32.totalorder %s28, 3
      %p145 = por %p143, %p144
      %p147 = scmp.ne.s32.totalorder %s130, %s146
      %p148 = scmp.eq.s32.totalorder %s28, 0
      %p149 = por %p147, %p148
      %s151 = sadd.s32 %s150, 1
      %p154 = scmp.eq.s32.totalorder %s22, 3
      %p155 = scmp.ne.s32.totalorder %s150, %s152
      %p156 = scmp.eq.s32.totalorder %s22, 0
      %p157 = por %p155, %p156
      %p158 = scmp.ne.s32.totalorder %s150, %s152
      %p159 = scmp.eq.s32.totalorder %s27, 3
      %p160 = por %p158, %p159
      %p161 = scmp.ne.s32.totalorder %s152, %s153
      %p162 = scmp.eq.s32.totalorder %s27, 0
      %p163 = por %p161, %p162
      %p164 = scmp.ne.s32.totalorder %s152, %s153
      %p165 = scmp.eq.s32.totalorder %s28, 3
      %p166 = por %p164, %p165
      %p168 = scmp.ne.s32.totalorder %s153, %s167
      %p169 = scmp.eq.s32.totalorder %s28, 0
      %p170 = por %p168, %p169
      %s172 = sadd.s32 %s171, 1
      %p175 = scmp.eq.s32.totalorder %s22, 3
      %p176 = scmp.ne.s32.totalorder %s171, %s173
      %p177 = scmp.eq.s32.totalorder %s22, 0
      %p178 = por %p176, %p177
      %p179 = scmp.ne.s32.totalorder %s171, %s173
      %p180 = scmp.eq.s32.totalorder %s27, 3
      %p181 = por %p179, %p180
      %p182 = scmp.ne.s32.totalorder %s173, %s174
      %p183 = scmp.eq.s32.totalorder %s27, 0
      %p184 = por %p182, %p183
      %p185 = scmp.ne.s32.totalorder %s173, %s174
      %p186 = scmp.eq.s32.totalorder %s28, 3
      %p187 = por %p185, %p186
      %p189 = scmp.ne.s32.totalorder %s174, %s188
      %p190 = scmp.eq.s32.totalorder %s28, 0
      %p191 = por %p189, %p190
      %p192 = scmp.le.s32.totalorder 1, %s22
      %p193 = scmp.lt.s32.totalorder %s22, 5
      %p194 = pnand %p192, %p193
      %p195 = pneg %p194
      // Predicated region
      $region9: #{tpu_custom_call.1} parent=5 // pred_check
        _
      $region10: #{tpu_custom_call.1} parent=5 // pred_check_branch
        %197 = sbr.rel (%p194) target = $region12
      $region11: #{tpu_custom_call.1} parent=5 // pred_region
        %s198 = ssub.s32 %s22, 1
        // Predicated region
        $region13: #{tpu_custom_call.1} parent=11 // pred_check
          %p199 = pneg %p163
        $region14: #{tpu_custom_call.1} parent=11 // pred_check_branch
          %201 = sbr.rel (%p199) target = $region16
        $region15: #{tpu_custom_call.1} parent=11 // pred_region
          %s203 = ssub.s32 16, 16
          %204 = vsyncadd [#allocation6], %s203
          %s206 = sshll.u32 %s4, 4
          %s207 = int_to_ptr.vmem [resolvable:$true] %s206
          %209 = dma.vmem_to_smem %s207, 16, [#allocation12], [#allocation6]
        $region16: #{tpu_custom_call.1} parent=11 // pred_fallthru
          _
      $region12: #{tpu_custom_call.1} parent=5 // pred_fallthru
        _
      %p210 = scmp.lt.s32.totalorder %s22, 4
      // Predicated region
      $region17: #{tpu_custom_call.1} parent=5 // pred_check
        %p211 = pneg %p210
      $region18: #{tpu_custom_call.1} parent=5 // pred_check_branch
        %213 = sbr.rel (%p211) target = $region20
      $region19: #{tpu_custom_call.1} parent=5 // pred_region
        // Predicated region
        $region21: #{tpu_custom_call.1} parent=19 // pred_check
          %p214 = pneg %p56
        $region22: #{tpu_custom_call.1} parent=19 // pred_check_branch
          %216 = sbr.rel (%p214) target = $region24
        $region23: #{tpu_custom_call.1} parent=19 // pred_region
          %s217 = sand.u32 %s46, 1
          %s218 = scalar_lea.sflag [#allocation4], %s217
          %s219 = sand.u32 %s46, 1
          %s220 = smul.addr %s219, 8
          %s221 = scalar_lea.vmem [#allocation3], %s220
          %s223 = ssub.s32 128, 128
          %224 = vsyncadd %s218, %s223
          %s225 = smul.addr %s30, 2
          %s226 = sadd.s32 %s29, %s225
          %s227 = smul.addr %s226, 128
          %s228 = scalar_lea.hbm %s0, %s227
          %s230 = sshll.u32 %s221, 4
          %s231 = int_to_ptr.vmem [resolvable:$true] %s230
          %233 = dma.hbm_to_vmem [thread:$0]  %s228, 128, %s231, %s218
        $region24: #{tpu_custom_call.1} parent=19 // pred_fallthru
          _
        // Predicated region
        $region25: #{tpu_custom_call.1} parent=19 // pred_check
          %p234 = pneg %p84
        $region26: #{tpu_custom_call.1} parent=19 // pred_check_branch
          %236 = sbr.rel (%p234) target = $region28
        $region27: #{tpu_custom_call.1} parent=19 // pred_region
          %s237 = sand.u32 %s22, 1
          %s238 = scalar_lea.sflag [#allocation8], %s237
          %s239 = sand.u32 %s74, 1
          %s240 = smul.addr %s239, 8
          %s241 = scalar_lea.vmem [#allocation7], %s240
          %s243 = ssub.s32 128, 128
          %244 = vsyncadd %s238, %s243
          %s245 = smul.addr %s30, 2
          %s246 = sadd.s32 %s29, %s245
          %s247 = smul.addr %s246, 128
          %s248 = scalar_lea.hbm %s1, %s247
          %s250 = sshll.u32 %s241, 4
          %s251 = int_to_ptr.vmem [resolvable:$true] %s250
          %253 = dma.hbm_to_vmem [thread:$0]  %s248, 128, %s251, %s238
        $region28: #{tpu_custom_call.1} parent=19 // pred_fallthru
          _
        // Predicated region
        $region29: #{tpu_custom_call.1} parent=19 // pred_check
          %p254 = pneg %p110
        $region30: #{tpu_custom_call.1} parent=19 // pred_check_branch
          %256 = sbr.rel (%p254) target = $region32
        $region31: #{tpu_custom_call.1} parent=19 // pred_region
          %s257 = sand.u32 %s22, 1
          %s258 = scalar_lea.sflag [#allocation8], %s257
          %s259 = sand.u32 %s100, 1
          %s260 = smul.addr %s259, 8
          %s261 = scalar_lea.vmem [#allocation9], %s260
          %s263 = ssub.s32 128, 128
          %264 = vsyncadd %s258, %s263
          %s265 = smul.addr %s29, 128
          %s266 = scalar_lea.hbm %s2, %s265
          %s268 = sshll.u32 %s261, 4
          %s269 = int_to_ptr.vmem [resolvable:$true] %s268
          %271 = dma.hbm_to_vmem [thread:$0]  %s266, 128, %s269, %s258
        $region32: #{tpu_custom_call.1} parent=19 // pred_fallthru
          _
        // Predicated region
        $region33: #{tpu_custom_call.1} parent=19 // pred_check
          %p272 = pneg %p136
        $region34: #{tpu_custom_call.1} parent=19 // pred_check_branch
          %274 = sbr.rel (%p272) target = $region36
        $region35: #{tpu_custom_call.1} parent=19 // pred_region
          %s275 = sand.u32 %s126, 1
          %s276 = scalar_lea.sflag [#allocation11], %s275
          %s277 = sand.u32 %s126, 1
          %s278 = smul.addr %s277, 8
          %s279 = scalar_lea.vmem [#allocation10], %s278
          %s281 = ssub.s32 128, 128
          %282 = vsyncadd %s276, %s281
          %s283 = smul.addr %s29, 128
          %s284 = scalar_lea.hbm %s3, %s283
          %s286 = sshll.u32 %s279, 4
          %s287 = int_to_ptr.vmem [resolvable:$true] %s286
          %289 = dma.hbm_to_vmem [thread:$0]  %s284, 128, %s287, %s276
        $region36: #{tpu_custom_call.1} parent=19 // pred_fallthru
          _
      $region20: #{tpu_custom_call.1} parent=5 // pred_fallthru
        _
      %p290 = scmp.le.s32.totalorder 1, %s22
      %p291 = scmp.lt.s32.totalorder %s22, 5
      %p292 = pnand %p290, %p291
      %p293 = pneg %p292
      // Predicated region
      $region37: #{tpu_custom_call.1} parent=5 // pred_check
        _
      $region38: #{tpu_custom_call.1} parent=5 // pred_check_branch
        %295 = sbr.rel (%p292) target = $region40
      $region39: #{tpu_custom_call.1} parent=5 // pred_region
        %s296 = ssub.s32 %s22, 1
        %s297 = sand.u32 %s49, 1
        %s298 = scalar_lea.sflag [#allocation4], %s297
        %s299 = sand.u32 %s49, 1
        %s300 = smul.addr %s299, 8
        %s301 = scalar_lea.vmem [#allocation3], %s300
        // Predicated region
        $region41: #{tpu_custom_call.1} parent=39 // pred_check
          %p302 = pneg %p62
        $region42: #{tpu_custom_call.1} parent=39 // pred_check_branch
          %304 = sbr.rel (%p302) target = $region44
        $region43: #{tpu_custom_call.1} parent=39 // pred_region
          %305 = dma.done %s298, 128
        $region44: #{tpu_custom_call.1} parent=39 // pred_fallthru
          _
        %s306 = sand.u32 %s27, 1
        %s307 = scalar_lea.sflag [#allocation8], %s306
        %s308 = sand.u32 %s77, 1
        %s309 = smul.addr %s308, 8
        %s310 = scalar_lea.vmem [#allocation7], %s309
        // Predicated region
        $region45: #{tpu_custom_call.1} parent=39 // pred_check
          %p311 = pneg %p90
        $region46: #{tpu_custom_call.1} parent=39 // pred_check_branch
          %313 = sbr.rel (%p311) target = $region48
        $region47: #{tpu_custom_call.1} parent=39 // pred_region
          %314 = dma.done %s307, 128
        $region48: #{tpu_custom_call.1} parent=39 // pred_fallthru
          _
        %s315 = sand.u32 %s27, 1
        %s316 = scalar_lea.sflag [#allocation8], %s315
        %s317 = sand.u32 %s103, 1
        %s318 = smul.addr %s317, 8
        %s319 = scalar_lea.vmem [#allocation9], %s318
        // Predicated region
        $region49: #{tpu_custom_call.1} parent=39 // pred_check
          %p320 = pneg %p116
        $region50: #{tpu_custom_call.1} parent=39 // pred_check_branch
          %322 = sbr.rel (%p320) target = $region52
        $region51: #{tpu_custom_call.1} parent=39 // pred_region
          %323 = dma.done %s316, 128
        $region52: #{tpu_custom_call.1} parent=39 // pred_fallthru
          _
        %s324 = sand.u32 %s129, 1
        %s325 = scalar_lea.sflag [#allocation11], %s324
        %s326 = sand.u32 %s129, 1
        %s327 = smul.addr %s326, 8
        %s328 = scalar_lea.vmem [#allocation10], %s327
        // Predicated region
        $region53: #{tpu_custom_call.1} parent=39 // pred_check
          %p329 = pneg %p142
        $region54: #{tpu_custom_call.1} parent=39 // pred_check_branch
          %331 = sbr.rel (%p329) target = $region56
        $region55: #{tpu_custom_call.1} parent=39 // pred_region
          %332 = dma.done %s325, 128
        $region56: #{tpu_custom_call.1} parent=39 // pred_fallthru
          _
        // Predicated region
        $region57: #{tpu_custom_call.1} parent=39 // pred_check
          %p333 = pneg %p163
        $region58: #{tpu_custom_call.1} parent=39 // pred_check_branch
          %335 = sbr.rel (%p333) target = $region60
        $region59: #{tpu_custom_call.1} parent=39 // pred_region
          %336 = dma.done [#allocation6], 16
        $region60: #{tpu_custom_call.1} parent=39 // pred_fallthru
          _
        %337 = sfence
        %s338 = sand.u32 %s49, 1
        %s339 = scalar_lea.sflag [#allocation4], %s338
        %s340 = sand.u32 %s49, 1
        %s341 = smul.addr %s340, 8
        %s342 = scalar_lea.vmem [#allocation3], %s341
        %p343 = pneg %p62
        %p344 = pneg %p59
        %s345 = sand.u32 %s27, 1
        %s346 = scalar_lea.sflag [#allocation8], %s345
        %s347 = sand.u32 %s77, 1
        %s348 = smul.addr %s347, 8
        %s349 = scalar_lea.vmem [#allocation7], %s348
        %p350 = pneg %p90
        %p351 = pneg %p87
        %s352 = sand.u32 %s27, 1
        %s353 = scalar_lea.sflag [#allocation8], %s352
        %s354 = sand.u32 %s103, 1
        %s355 = smul.addr %s354, 8
        %s356 = scalar_lea.vmem [#allocation9], %s355
        %p357 = pneg %p116
        %p358 = pneg %p113
        %s359 = sand.u32 %s129, 1
        %s360 = scalar_lea.sflag [#allocation11], %s359
        %s361 = sand.u32 %s129, 1
        %s362 = smul.addr %s361, 8
        %s363 = scalar_lea.vmem [#allocation10], %s362
        %p364 = pneg %p142
        %p365 = pneg %p139
        %p366 = pneg %p163
        %p367 = pneg %p160
        %p368 = pneg %p184
        %p369 = pneg %p181
        %p370 = scmp.eq.s32.totalorder %s31, 0
        %p371 = scmp.eq.s32.totalorder %s32, 0
        %p372 = pnand %p370, %p371
        %p373 = pneg %p372
        // Predicated region
        $region61: #{tpu_custom_call.1} parent=39 // pred_check
          _
        $region62: #{tpu_custom_call.1} parent=39 // pred_check_branch
          %375 = sbr.rel (%p372) target = $region64
        $region63: #{tpu_custom_call.1} parent=39 // pred_region
          %376 = vst [vmem:[#allocation2] sm:$0xff] 0.0
          %377 = vst [vmem:[#allocation2 + $0x8] sm:$0xff] 0.0
          %378 = vst [vmem:[#allocation2 + $0x10] sm:$0xff] 0.0
          %379 = vst [vmem:[#allocation2 + $0x18] sm:$0xff] 0.0
          %380 = vst [vmem:[#allocation2 + $0x20] sm:$0xff] 0.0
          %381 = vst [vmem:[#allocation2 + $0x28] sm:$0xff] 0.0
        $region64: #{tpu_custom_call.1} parent=39 // pred_fallthru
          _
        %v382 = vld [vmem:[%s301] sm:$0xff]
        %v383 = vld [vmem:[%s310] sm:$0xff]
        %v384 = vld [vmem:[%s319] sm:$0xff]
        %v385 = vld [vmem:[%s328] sm:$0xff]
        %v386 = vmul.f32 %v384, %v383
        %v387 = vmul.f32 %v382, 6.0
        %v388 = vtanh.pop %v387
        %v389 = vmul.f32 %v388, 0.5
        %v390 = vadd.f32 %v389, 0.5
        %v391 = vmul.f32 %v386, %v390
        %s392 = sld [smem:[#allocation12]]
        %v393 = vstv %s392
        %vm394 = vcmp.eq.f32.partialorder %v385, %v393
        %v395 = vsel %vm394, %v391, 0.0
        %v396 = vld [vmem:[#allocation2] sm:$0xff]
        %v397 = vadd.f32 %v395, 0.0
        %v398 = vadd.f32 %v396, %v397
        %399 = vst [vmem:[#allocation2] sm:$0xff] %v398
        %s400 = sld [smem:[#allocation12 + $0x1]]
        %v401 = vstv %s400
        %vm402 = vcmp.eq.f32.partialorder %v385, %v401
        %v403 = vsel %vm402, %v391, 0.0
        %s404 = scalar_lea.vmem [#allocation2], 8
        %v405 = vld [vmem:[%s404] sm:$0xff]
        %v406 = vadd.f32 %v403, 0.0
        %v407 = vadd.f32 %v405, %v406
        %408 = vst [vmem:[%s404] sm:$0xff] %v407
        %s409 = sld [smem:[#allocation12 + $0x2]]
        %v410 = vstv %s409
        %vm411 = vcmp.eq.f32.partialorder %v385, %v410
        %v412 = vsel %vm411, %v391, 0.0
        %s413 = scalar_lea.vmem [#allocation2], 16
        %v414 = vld [vmem:[%s413] sm:$0xff]
        %v415 = vadd.f32 %v412, 0.0
        %v416 = vadd.f32 %v414, %v415
        %417 = vst [vmem:[%s413] sm:$0xff] %v416
        %s418 = sld [smem:[#allocation12 + $0x3]]
        %v419 = vstv %s418
        %vm420 = vcmp.eq.f32.partialorder %v385, %v419
        %v421 = vsel %vm420, %v391, 0.0
        %s422 = scalar_lea.vmem [#allocation2], 24
        %v423 = vld [vmem:[%s422] sm:$0xff]
        %v424 = vadd.f32 %v421, 0.0
        %v425 = vadd.f32 %v423, %v424
        %426 = vst [vmem:[%s422] sm:$0xff] %v425
        %s427 = sld [smem:[#allocation12 + $0x4]]
        %v428 = vstv %s427
        %vm429 = vcmp.eq.f32.partialorder %v385, %v428
        %v430 = vsel %vm429, %v391, 0.0
        %s431 = scalar_lea.vmem [#allocation2], 32
        %v432 = vld [vmem:[%s431] sm:$0xff]
        %v433 = vadd.f32 %v430, 0.0
        %v434 = vadd.f32 %v432, %v433
        %435 = vst [vmem:[%s431] sm:$0xff] %v434
        %s436 = sld [smem:[#allocation12 + $0x5]]
        %v437 = vstv %s436
        %vm438 = vcmp.eq.f32.partialorder %v385, %v437
        %v439 = vsel %vm438, %v391, 0.0
        %s440 = scalar_lea.vmem [#allocation2], 40
        %v441 = vld [vmem:[%s440] sm:$0xff]
        %v442 = vadd.f32 %v439, 0.0
        %v443 = vadd.f32 %v441, %v442
        %444 = vst [vmem:[%s440] sm:$0xff] %v443
        %p445 = scmp.eq.s32.totalorder %s31, 1
        %p446 = scmp.eq.s32.totalorder %s32, 1
        %p447 = pnand %p445, %p446
        %p448 = pneg %p447
        // Predicated region
        $region65: #{tpu_custom_call.1} parent=39 // pred_check
          _
        $region66: #{tpu_custom_call.1} parent=39 // pred_check_branch
          %450 = sbr.rel (%p447) target = $region68
        $region67: #{tpu_custom_call.1} parent=39 // pred_region
          %v451 = vld [vmem:[#allocation2] sm:$0xff]
          %v452 = vld [vmem:[#allocation2 + $0x8] sm:$0xff]
          %v453 = vld [vmem:[#allocation2 + $0x10] sm:$0xff]
          %v454 = vld [vmem:[#allocation2 + $0x18] sm:$0xff]
          %v455 = vld [vmem:[#allocation2 + $0x20] sm:$0xff]
          %v456 = vld [vmem:[#allocation2 + $0x28] sm:$0xff]
          %v457 = vrot.slane %v451, 4
          %v458 = vadd.f32 %v451, %v457
          %v459 = vrot.slane %v458, 2
          %v460 = vadd.f32 %v458, %v459
          %v461 = vrot.slane %v460, 1
          %v462 = vadd.f32 %v460, %v461
          %v463 = vrot.slane %v452, 4
          %v464 = vadd.f32 %v452, %v463
          %v465 = vrot.slane %v464, 2
          %v466 = vadd.f32 %v464, %v465
          %v467 = vrot.slane %v466, 1
          %v468 = vadd.f32 %v466, %v467
          %v469 = vrot.slane %v453, 4
          %v470 = vadd.f32 %v453, %v469
          %v471 = vrot.slane %v470, 2
          %v472 = vadd.f32 %v470, %v471
          %v473 = vrot.slane %v472, 1
          %v474 = vadd.f32 %v472, %v473
          %v475 = vrot.slane %v454, 4
          %v476 = vadd.f32 %v454, %v475
          %v477 = vrot.slane %v476, 2
          %v478 = vadd.f32 %v476, %v477
          %v479 = vrot.slane %v478, 1
          %v480 = vadd.f32 %v478, %v479
          %v481 = vrot.slane %v455, 4
          %v482 = vadd.f32 %v455, %v481
          %v483 = vrot.slane %v482, 2
          %v484 = vadd.f32 %v482, %v483
          %v485 = vrot.slane %v484, 1
          %v486 = vadd.f32 %v484, %v485
          %v487 = vrot.slane %v456, 4
          %v488 = vadd.f32 %v456, %v487
          %v489 = vrot.slane %v488, 2
          %v490 = vadd.f32 %v488, %v489
          %v491 = vrot.slane %v490, 1
          %v492 = vadd.f32 %v490, %v491
          %vm499 = vcmask 1041409
          %v500 = vsel %vm499, %v468, %v462
          %vm501 = vcmask 1042434
          %v502 = vsel %vm501, %v474, %v500
          %vm503 = vcmask 1043459
          %v504 = vsel %vm503, %v480, %v502
          %vm505 = vcmask 1044484
          %v506 = vsel %vm505, %v486, %v504
          %vm507 = vcmask 1045509
          %v508 = vsel %vm507, %v492, %v506
          %vm510 = vcmask 1045504
          %v511 = vsel %vm510, %v508, 0.0
          %512 = vadd.xlane.f32.xlu0 %v511
          %v513 = vpop.xlane.xlu0 %512
          %v514 = vsel %vm510, %v513, 0.0
          %v515 = vrot.slane %v514, 4
          %v516 = vadd.f32 %v514, %v515
          %v517 = vrot.slane %v516, 2
          %v518 = vadd.f32 %v516, %v517
          %v519 = vrot.slane %v518, 1
          %v520 = vadd.f32 %v518, %v519
          %v521 = vmul.f32 %v513, %v513
          %v522 = vsel %vm510, %v521, 0.0
          %v523 = vrot.slane %v522, 4
          %v524 = vadd.f32 %v522, %v523
          %v525 = vrot.slane %v524, 2
          %v526 = vadd.f32 %v524, %v525
          %v527 = vrot.slane %v526, 1
          %v528 = vadd.f32 %v526, %v527
          %v529 = vmul.f32 %v520, -1.0
          %v530 = vmax.f32 %v520, 0.0
          %v531 = vmul.f32 %v529, %v530
          %v532 = vrcp.pop %v528
          %v533 = vmul.f32 %v531, %v532
          %v534 = vrcp.pop 6.0
          %v535 = vmul.f32 %v533, %v534
          %vm536 = vcmask 0
          %537 = vst.msk [vmem:[#allocation13] sm:$0x1] %vm536, %v535
        $region68: #{tpu_custom_call.1} parent=39 // pred_fallthru
          _
        // Predicated region
        $region69: #{tpu_custom_call.1} parent=39 // pred_check
          %p538 = pneg %p181
        $region70: #{tpu_custom_call.1} parent=39 // pred_check_branch
          %540 = sbr.rel (%p538) target = $region72
        $region71: #{tpu_custom_call.1} parent=39 // pred_region
          %s542 = ssub.s32 16, 16
          %543 = vsyncadd [#allocation5], %s542
          %s545 = sshll.u32 [#allocation13], 4
          %s546 = int_to_ptr.vmem [resolvable:$true] %s545
          %548 = dma.vmem_to_hbm [thread:$0]  %s546, 16, %s5, [#allocation5]
        $region72: #{tpu_custom_call.1} parent=39 // pred_fallthru
          _
        // Predicated region
        $region73: #{tpu_custom_call.1} parent=39 // pred_check
          %p549 = pneg %p181
        $region74: #{tpu_custom_call.1} parent=39 // pred_check_branch
          %551 = sbr.rel (%p549) target = $region76
        $region75: #{tpu_custom_call.1} parent=39 // pred_region
          %552 = dma.done [#allocation5], 16
        $region76: #{tpu_custom_call.1} parent=39 // pred_fallthru
          _
      $region40: #{tpu_custom_call.1} parent=5 // pred_fallthru
        _
      %p553 = scmp.le.s32.totalorder 2, %s22
      // Predicated region
      $region77: #{tpu_custom_call.1} parent=5 // pred_check
        %p554 = pneg %p553
      $region78: #{tpu_custom_call.1} parent=5 // pred_check_branch
        %556 = sbr.rel (%p554) target = $region80
      $region79: #{tpu_custom_call.1} parent=5 // pred_region
        %s557 = ssub.s32 %s22, 2
      $region80: #{tpu_custom_call.1} parent=5 // pred_fallthru
        _
    $region6: #{tpu_custom_call.1} parent=1 // loop_footer
      %s26 = sadd.s32 1, %s22
    $region7: #{tpu_custom_call.1} parent=1 // loop_footer_branch
      %21 = sbr.rel target = $region3
    $region8: #{tpu_custom_call.1} parent=1 // loop_exit
      _
    %558 = vsyncpa [#allocation4], 1
    %s559 = scalar_lea.sflag [#allocation4], 1
    %560 = vsyncpa %s559, 1
    %561 = vsyncpa [#allocation8], 1
    %s562 = scalar_lea.sflag [#allocation8], 1
    %563 = vsyncpa %s562, 1
    %564 = vsyncpa [#allocation11], 1
    %s565 = scalar_lea.sflag [#allocation11], 1
    %566 = vsyncpa %s565, 1
    %567 = vsyncpa [#allocation5], 1
    %s568 = scalar_lea.sflag [#allocation5], 1
    %569 = vsyncpa %s568, 1
    %570 = vsyncpa [#allocation6], 1
    %s571 = scalar_lea.sflag [#allocation6], 1
    %572 = vsyncpa %s571, 1

</llo_original>
